<compile_context>
chip_gen: v5e
topology: v5e:2x2
jax: 0.10.0
libtpu: 0.0.40
codegen_flags: <defaults>
</compile_context>

<pallas_src>
import jax
import jax.numpy as jnp
from jax.experimental import pallas as pl
from jax.experimental.pallas import tpu as pltpu


def _elu(x):
    # ELU(alpha=1.0), matching torch.nn.ELU default used by activation_func('elu').
    # Clamp the exp argument so large positive x never produces +inf intermediates.
    neg = jnp.exp(jnp.minimum(x, 0.0)) - 1.0
    return jnp.where(x > 0, x, neg)


def base_mlp_kernel(x_ref, w1_ref, b1_ref, w2_ref, b2_ref, wo_ref, bo_ref, o_ref):
    cd = w1_ref.dtype  # MXU-input compute dtype (bf16 by default, f32 optional)
    # In-kernel cast of x (wrapper-side cast would be an extra un-hidden HBM pass).
    x = x_ref[...].astype(cd)
    # Hidden layer 1: Linear + ELU  (MXU matmul, f32 accumulate; ELU/bias in f32)
    h = jnp.dot(x, w1_ref[...], preferred_element_type=jnp.float32) + b1_ref[...]
    h = _elu(h)
    # Hidden layer 2: Linear + ELU
    h = jnp.dot(h.astype(cd), w2_ref[...], preferred_element_type=jnp.float32) + b2_ref[...]
    h = _elu(h)
    # Output head: Linear (no activation)
    out = jnp.dot(h.astype(cd), wo_ref[...], preferred_element_type=jnp.float32) + bo_ref[...]
    o_ref[...] = out.astype(o_ref.dtype)


def _round_up(v, m):
    return -(-v // m) * m


def _pick_batch_tile(B, cap=4096, sub=8):
    """Pick a batch tile:
      * tiny batches: one full block (full-extent block is always legal),
      * otherwise: <= cap rows/step, multiple of 8 (f32 sublane), and >= 2 grid
        steps so v7x's two TensorCores both get work on the 'parallel' axis.
    The grid uses pl.cdiv, so the tile does NOT need to divide B (tail is masked)."""
    if B < 2 * sub:
        return B
    target = min(cap, -(-B // 2))           # aim for >= 2 steps, capped per step
    return max(sub, (target // sub) * sub)  # round down to multiple of 8


def base_mlp_forward(x, params, *, batch_tile=None, compute_dtype=jnp.bfloat16,
                     out_dtype=None):
    """Fused MLP forward. x: [B, input_dim]. params: dict of f32 weights/biases."""
    B, Din = x.shape
    w1, b1 = params["w1"], params["b1"]
    w2, b2 = params["w2"], params["b2"]
    wo, bo = params["wo"], params["bo"]
    H1 = w1.shape[1]
    H2 = w2.shape[1]
    Dout = wo.shape[1]

    if out_dtype is None:
        out_dtype = x.dtype
    if batch_tile is None:
        batch_tile = _pick_batch_tile(B)
    assert batch_tile == B or batch_tile % 8 == 0, (
        "batch_tile must be a multiple of 8 (f32 sublane) or equal the full batch")
    grid = (pl.cdiv(B, batch_tile),)  # tail block (if any) is masked on write

    # Weights are tiny (~29 KB): pre-cast once in the wrapper; biases stay f32
    # (added post-matmul in f32). x is NOT cast here (done inside the kernel).
    w1_c, w2_c, wo_c = (w.astype(compute_dtype) for w in (w1, w2, wo))
    b1_f, b2_f, bo_f = (b.astype(jnp.float32) for b in (b1, b2, bo))

    # Weights/biases VMEM-resident: constant block index (0,0) => no re-DMA per step.
    full = lambda i: (0, 0)

    x_item = x.dtype.itemsize
    out_item = jnp.dtype(out_dtype).itemsize
    w_item = jnp.dtype(compute_dtype).itemsize
    cost = pl.CostEstimate(
        flops=2 * B * (Din * H1 + H1 * H2 + H2 * Dout),
        transcendentals=B * (H1 + H2),
        bytes_accessed=(B * Din * x_item + B * Dout * out_item
                        + (Din * H1 + H1 * H2 + H2 * Dout) * w_item
                        + (H1 + H2 + Dout) * 4),
    )

    # Explicit VMEM budget from lane-padded, double-buffered blocks + activation /
    # spill headroom.  Clamped to [32 MiB, 48 MiB]: above every generation's default
    # scoped limit (v5e 16 MiB, v6e/v7x 32 MiB) yet safely under v7x's 64 MiB physical.
    lane = 128
    x_vmem = batch_tile * _round_up(Din, lane) * x_item * 2
    o_vmem = batch_tile * _round_up(Dout, lane) * out_item * 2
    act_vmem = batch_tile * _round_up(max(H1, H2), lane) * 4 * 4  # f32 activations/spill
    vmem_limit = int(min(max(x_vmem + o_vmem + act_vmem + (2 << 20), 32 << 20), 48 << 20))

    return pl.pallas_call(
        base_mlp_kernel,
        out_shape=jax.ShapeDtypeStruct((B, Dout), out_dtype),
        grid_spec=pltpu.PrefetchScalarGridSpec(
            num_scalar_prefetch=0,
            grid=grid,
            in_specs=[
                pl.BlockSpec((batch_tile, Din), lambda i: (i, 0)),   # x tile
                pl.BlockSpec((Din, H1), full),                       # W1
                pl.BlockSpec((1, H1), full),                         # b1
                pl.BlockSpec((H1, H2), full),                        # W2
                pl.BlockSpec((1, H2), full),                         # b2
                pl.BlockSpec((H2, Dout), full),                      # Wo
                pl.BlockSpec((1, Dout), full),                       # bo
            ],
            out_specs=pl.BlockSpec((batch_tile, Dout), lambda i: (i, 0)),
        ),
        compiler_params=pltpu.CompilerParams(
            # Batch axis is embarrassingly parallel -> megacore sharding on v7x.
            dimension_semantics=("parallel",),
            vmem_limit_bytes=vmem_limit,
        ),
        cost_estimate=cost,
    )(x, w1_c, b1_f, w2_c, b2_f, wo_c, bo_f)


def init_params(key, input_dim, hidden_dims, output_dim):
    """Deterministic synthetic init (init_layers uses orthogonal w/ gain=1, zero bias;
    here scaled-normal weights + zero bias — shapes/semantics identical)."""
    dims = [input_dim, *hidden_dims]
    keys = jax.random.split(key, len(dims))  # one key per Linear (2 hidden + 1 out)
    params = {}
    params["w1"] = (jax.random.normal(keys[0], (dims[0], dims[1]), jnp.float32)
                    / jnp.sqrt(dims[0]))
    params["b1"] = jnp.zeros((1, dims[1]), jnp.float32)
    params["w2"] = (jax.random.normal(keys[1], (dims[1], dims[2]), jnp.float32)
                    / jnp.sqrt(dims[1]))
    params["b2"] = jnp.zeros((1, dims[2]), jnp.float32)
    params["wo"] = (jax.random.normal(keys[2], (dims[2], output_dim), jnp.float32)
                    / jnp.sqrt(dims[2]))
    params["bo"] = jnp.zeros((1, output_dim), jnp.float32)
    return params


def base_mlp_reference(x, params, compute_dtype=jnp.bfloat16):
    """Pure-JAX reference with the same mixed-precision contract as the kernel."""
    cd = compute_dtype

    def lin(a, w, b):
        return jnp.dot(a.astype(cd), w.astype(cd),
                       preferred_element_type=jnp.float32) + b.astype(jnp.float32)

    h = _elu(lin(x, params["w1"], params["b1"]))
    h = _elu(lin(h, params["w2"], params["b2"]))
    return lin(h, params["wo"], params["bo"])


if __name__ == "__main__":
    # Small shapes consistent with the module: cfg gives mlp_hidden_dims=[64, 64],
    # mlp_activation='elu'; input_dim=32, output_dim=16, batch=8.
    batch, input_dim, output_dim = 8, 32, 16
    hidden_dims = [64, 64]

    key = jax.random.PRNGKey(0)
    kx, kp, kx2 = jax.random.split(key, 3)
    x = jax.random.normal(kx, (batch, input_dim), jnp.float32)
    params = init_params(kp, input_dim, hidden_dims, output_dim)

    out = base_mlp_forward(x, params)
    out = jax.block_until_ready(out)

    ref_mixed = base_mlp_reference(x, params, compute_dtype=jnp.bfloat16)
    ref_f32 = base_mlp_reference(x, params, compute_dtype=jnp.float32)

    assert out.shape == (batch, output_dim)
    # Tight check vs. same-precision (bf16-input, f32-accumulate) reference.
    assert jnp.allclose(out, ref_mixed, atol=2e-3, rtol=2e-3), "mismatch vs mixed-precision reference"
    # Loose check vs. full-f32 reference (bf16 input quantization bounds the error).
    assert jnp.allclose(out, ref_f32, atol=1e-1, rtol=1e-1), "mismatch vs f32 reference"

    # Second check: batch that is not a multiple of the chosen tile (exercises the
    # cdiv grid + masked tail block and the multi-step 'parallel' batch axis).
    B2 = 1000
    x2 = jax.random.normal(kx2, (B2, input_dim), jnp.float32)
    out2 = jax.block_until_ready(base_mlp_forward(x2, params))
    ref2 = base_mlp_reference(x2, params, compute_dtype=jnp.bfloat16)
    assert out2.shape == (B2, output_dim)
    assert jnp.allclose(out2, ref2, atol=2e-3, rtol=2e-3), "mismatch on tiled/masked batch"

    print("KERNEL_OK")
</pallas_src>

<mosaic_0001>
module attributes {stable_mosaic.version = 11 : i64} {
  func.func @base_mlp_kernel(%arg0: i32, %arg1: memref<8x32xf32, #tpu.memory_space<vmem>>, %arg2: memref<32x64xbf16, #tpu.memory_space<vmem>>, %arg3: memref<1x64xf32, #tpu.memory_space<vmem>>, %arg4: memref<64x64xbf16, #tpu.memory_space<vmem>>, %arg5: memref<1x64xf32, #tpu.memory_space<vmem>>, %arg6: memref<64x16xbf16, #tpu.memory_space<vmem>>, %arg7: memref<1x16xf32, #tpu.memory_space<vmem>>, %arg8: memref<8x16xf32, #tpu.memory_space<vmem>>) attributes {dimension_semantics = [#tpu.dimension_semantics<parallel>], iteration_bounds = array<i64: 1>, scalar_prefetch = 0 : i64, scratch_operands = 0 : i64, tpu.core_type = #tpu.core_type<tc>, window_params = [{transform_indices = @transform_0, window_bounds = array<i64: 8, 32>}, {pipeline_mode = #tpu.pipeline_mode<synchronous>, transform_indices = @transform_1, window_bounds = array<i64: 32, 64>}, {pipeline_mode = #tpu.pipeline_mode<synchronous>, transform_indices = @transform_2, window_bounds = array<i64: 1, 64>}, {pipeline_mode = #tpu.pipeline_mode<synchronous>, transform_indices = @transform_3, window_bounds = array<i64: 64, 64>}, {pipeline_mode = #tpu.pipeline_mode<synchronous>, transform_indices = @transform_4, window_bounds = array<i64: 1, 64>}, {pipeline_mode = #tpu.pipeline_mode<synchronous>, transform_indices = @transform_5, window_bounds = array<i64: 64, 16>}, {pipeline_mode = #tpu.pipeline_mode<synchronous>, transform_indices = @transform_6, window_bounds = array<i64: 1, 16>}, {transform_indices = @transform_7, window_bounds = array<i64: 8, 16>}]} {
    %c0 = arith.constant 0 : index
    %c0_0 = arith.constant 0 : index
    %0 = vector.load %arg1[%c0, %c0_0] : memref<8x32xf32, #tpu.memory_space<vmem>>, vector<8x32xf32>
    %1 = arith.truncf %0 : vector<8x32xf32> to vector<8x32xbf16>
    %c0_1 = arith.constant 0 : index
    %c0_2 = arith.constant 0 : index
    %2 = vector.load %arg2[%c0_1, %c0_2] : memref<32x64xbf16, #tpu.memory_space<vmem>>, vector<32x64xbf16>
    %cst = arith.constant dense<0.000000e+00> : vector<8x64xf32>
    %3 = tpu.matmul %1, %2, %cst {dimension_numbers = #tpu.dot_dimension_numbers<[1], [0], [0], [1], [0, 0, 1, 1], [], []>} : vector<8x32xbf16>, vector<32x64xbf16>, vector<8x64xf32> -> vector<8x64xf32>
    %c0_3 = arith.constant 0 : index
    %c0_4 = arith.constant 0 : index
    %4 = vector.load %arg3[%c0_3, %c0_4] : memref<1x64xf32, #tpu.memory_space<vmem>>, vector<1x64xf32>
    %5 = vector.broadcast %4 : vector<1x64xf32> to vector<8x64xf32>
    %6 = arith.addf %3, %5 : vector<8x64xf32>
    %cst_5 = arith.constant 0.000000e+00 : f32
    %7 = vector.broadcast %cst_5 : f32 to vector<8x64xf32>
    %8 = arith.minimumf %6, %7 : vector<8x64xf32>
    %9 = math.exp %8 : vector<8x64xf32>
    %cst_6 = arith.constant 1.000000e+00 : f32
    %10 = vector.broadcast %cst_6 : f32 to vector<8x64xf32>
    %11 = arith.subf %9, %10 : vector<8x64xf32>
    %cst_7 = arith.constant 0.000000e+00 : f32
    %12 = vector.broadcast %cst_7 : f32 to vector<8x64xf32>
    %13 = arith.cmpf ogt, %6, %12 : vector<8x64xf32>
    %14 = arith.select %13, %6, %11 : vector<8x64xi1>, vector<8x64xf32>
    %15 = arith.truncf %14 : vector<8x64xf32> to vector<8x64xbf16>
    %c0_8 = arith.constant 0 : index
    %c0_9 = arith.constant 0 : index
    %16 = vector.load %arg4[%c0_8, %c0_9] : memref<64x64xbf16, #tpu.memory_space<vmem>>, vector<64x64xbf16>
    %cst_10 = arith.constant dense<0.000000e+00> : vector<8x64xf32>
    %17 = tpu.matmul %15, %16, %cst_10 {dimension_numbers = #tpu.dot_dimension_numbers<[1], [0], [0], [1], [0, 0, 1, 1], [], []>} : vector<8x64xbf16>, vector<64x64xbf16>, vector<8x64xf32> -> vector<8x64xf32>
    %c0_11 = arith.constant 0 : index
    %c0_12 = arith.constant 0 : index
    %18 = vector.load %arg5[%c0_11, %c0_12] : memref<1x64xf32, #tpu.memory_space<vmem>>, vector<1x64xf32>
    %19 = vector.broadcast %18 : vector<1x64xf32> to vector<8x64xf32>
    %20 = arith.addf %17, %19 : vector<8x64xf32>
    %cst_13 = arith.constant 0.000000e+00 : f32
    %21 = vector.broadcast %cst_13 : f32 to vector<8x64xf32>
    %22 = arith.minimumf %20, %21 : vector<8x64xf32>
    %23 = math.exp %22 : vector<8x64xf32>
    %cst_14 = arith.constant 1.000000e+00 : f32
    %24 = vector.broadcast %cst_14 : f32 to vector<8x64xf32>
    %25 = arith.subf %23, %24 : vector<8x64xf32>
    %cst_15 = arith.constant 0.000000e+00 : f32
    %26 = vector.broadcast %cst_15 : f32 to vector<8x64xf32>
    %27 = arith.cmpf ogt, %20, %26 : vector<8x64xf32>
    %28 = arith.select %27, %20, %25 : vector<8x64xi1>, vector<8x64xf32>
    %29 = arith.truncf %28 : vector<8x64xf32> to vector<8x64xbf16>
    %c0_16 = arith.constant 0 : index
    %c0_17 = arith.constant 0 : index
    %30 = vector.load %arg6[%c0_16, %c0_17] : memref<64x16xbf16, #tpu.memory_space<vmem>>, vector<64x16xbf16>
    %cst_18 = arith.constant dense<0.000000e+00> : vector<8x16xf32>
    %31 = tpu.matmul %29, %30, %cst_18 {dimension_numbers = #tpu.dot_dimension_numbers<[1], [0], [0], [1], [0, 0, 1, 1], [], []>} : vector<8x64xbf16>, vector<64x16xbf16>, vector<8x16xf32> -> vector<8x16xf32>
    %c0_19 = arith.constant 0 : index
    %c0_20 = arith.constant 0 : index
    %32 = vector.load %arg7[%c0_19, %c0_20] : memref<1x16xf32, #tpu.memory_space<vmem>>, vector<1x16xf32>
    %33 = vector.broadcast %32 : vector<1x16xf32> to vector<8x16xf32>
    %34 = arith.addf %31, %33 : vector<8x16xf32>
    %c0_21 = arith.constant 0 : index
    %c0_22 = arith.constant 0 : index
    %35 = vector.load %arg8[%c0_21, %c0_22] : memref<8x16xf32, #tpu.memory_space<vmem>>, vector<8x16xf32>
    tpu.vector_store %arg8[%c0_21, %c0_22], %34 {strides = array<i32>} : memref<8x16xf32, #tpu.memory_space<vmem>>, vector<8x16xf32>,
    return
  }
  func.func @transform_0(%arg0: i32) -> (i32, i32) {
    %c0_i32 = arith.constant 0 : i32
    %c0_i32_0 = arith.constant 0 : i32
    return %arg0, %c0_i32 : i32, i32
  }
  func.func @transform_1(%arg0: i32) -> (i32, i32) {
    %c0_i32 = arith.constant 0 : i32
    %c0_i32_0 = arith.constant 0 : i32
    %c0_i32_1 = arith.constant 0 : i32
    return %c0_i32, %c0_i32_0 : i32, i32
  }
  func.func @transform_2(%arg0: i32) -> (i32, i32) {
    %c0_i32 = arith.constant 0 : i32
    %c0_i32_0 = arith.constant 0 : i32
    %c0_i32_1 = arith.constant 0 : i32
    return %c0_i32, %c0_i32_0 : i32, i32
  }
  func.func @transform_3(%arg0: i32) -> (i32, i32) {
    %c0_i32 = arith.constant 0 : i32
    %c0_i32_0 = arith.constant 0 : i32
    %c0_i32_1 = arith.constant 0 : i32
    return %c0_i32, %c0_i32_0 : i32, i32
  }
  func.func @transform_4(%arg0: i32) -> (i32, i32) {
    %c0_i32 = arith.constant 0 : i32
    %c0_i32_0 = arith.constant 0 : i32
    %c0_i32_1 = arith.constant 0 : i32
    return %c0_i32, %c0_i32_0 : i32, i32
  }
  func.func @transform_5(%arg0: i32) -> (i32, i32) {
    %c0_i32 = arith.constant 0 : i32
    %c0_i32_0 = arith.constant 0 : i32
    %c0_i32_1 = arith.constant 0 : i32
    return %c0_i32, %c0_i32_0 : i32, i32
  }
  func.func @transform_6(%arg0: i32) -> (i32, i32) {
    %c0_i32 = arith.constant 0 : i32
    %c0_i32_0 = arith.constant 0 : i32
    %c0_i32_1 = arith.constant 0 : i32
    return %c0_i32, %c0_i32_0 : i32, i32
  }
  func.func @transform_7(%arg0: i32) -> (i32, i32) {
    %c0_i32 = arith.constant 0 : i32
    %c0_i32_0 = arith.constant 0 : i32
    return %arg0, %c0_i32 : i32, i32
  }
}

</mosaic_0001>

<llo_original>
// kernel: tpu_custom_call.1
$region0: #{tpu_custom_call.1}
  #allocation0 [shape = 'u32[]', space=smem, size = 0x4, offset = 0x4, fixed_abs, tag = 'smem constant byte address 0x4 - core index']
  #allocation1 [shape = 'u32[72,128]{1,0:T(1,128)}', space=vmem, size = 0x9000, scoped, tag = 'internal scratch']
  %s0 = inlined_call_operand.vmem [shape: f32[8,32], index: 0, kind: input, shape index: {}]
  %s1 = inlined_call_operand.hbm [shape: bf16[32,64], index: 1, kind: input, shape index: {}]
  %s2 = inlined_call_operand.vmem [shape: f32[1,64], index: 2, kind: input, shape index: {}]
  %s3 = inlined_call_operand.vmem [shape: bf16[64,64], index: 3, kind: input, shape index: {}]
  %s4 = inlined_call_operand.vmem [shape: f32[1,64], index: 4, kind: input, shape index: {}]
  %s5 = inlined_call_operand.vmem [shape: bf16[64,16], index: 5, kind: input, shape index: {}]
  %s6 = inlined_call_operand.vmem [shape: f32[1,16], index: 6, kind: input, shape index: {}]
  %s7 = inlined_call_operand.hbm [shape: f32[8,16], index: 7, kind: output, shape index: {}]
  %s8 = sld [smem:[#allocation0]]
  $region42: #{tpu_custom_call.1} parent=0
    _
  %s10 = ssub.s32 1, %s8
  %s11 = scalar_select 0, %s10, %s8
  $region1: #{tpu_custom_call.1} parent=0
    #allocation2 [shape = 'u8[8192]{0}', space=vmem, size = 0x2000, scoped, tag = 'input window, operand 1, single buffered']
    #allocation3 [shape = 's32[1]{0}', space=sflag, size = 0x4, scoped, tag = 'scoped memory for tpu_custom_call.1']
    #allocation4 [shape = 's32[1]{0}', space=sflag, size = 0x4, scoped, tag = 'scoped memory for tpu_custom_call.1']
    #allocation5 [shape = 'u8[4096]{0}', space=vmem, size = 0x1000, scoped, tag = 'output window, operand 0, single buffered']
    %12 = vsyncpa [#allocation3], 0
    %13 = vsyncpa [#allocation4], 0
    // Predicated region
    $region2: #{tpu_custom_call.1} parent=1 // pred_check
      _
    $region3: #{tpu_custom_call.1} parent=1 // pred_check_branch
      %15 = sbr.rel (0) target = $region5
    $region4: #{tpu_custom_call.1} parent=1 // pred_region
      _
    $region5: #{tpu_custom_call.1} parent=1 // pred_fallthru
      _
    // Predicated region
    $region6: #{tpu_custom_call.1} parent=1 // pred_check
      _
    $region7: #{tpu_custom_call.1} parent=1 // pred_check_branch
      %17 = sbr.rel (0) target = $region9
    $region8: #{tpu_custom_call.1} parent=1 // pred_region
      %19 = vsyncadd [#allocation3], 0
      %s20 = sshll.u32 %s1, 4
      %s21 = int_to_ptr.hbm [resolvable:$true] %s20
      %s22 = sshll.u32 [#allocation2], 4
      %s23 = int_to_ptr.vmem [resolvable:$true] %s22
      %28 = dma.hbm_to_vmem [thread:$0]  %s21, 256, %s23, [#allocation3], 64, 64, 4
    $region9: #{tpu_custom_call.1} parent=1 // pred_fallthru
      _
    // Predicated region
    $region10: #{tpu_custom_call.1} parent=1 // pred_check
      _
    $region11: #{tpu_custom_call.1} parent=1 // pred_check_branch
      %30 = sbr.rel (0) target = $region13
    $region12: #{tpu_custom_call.1} parent=1 // pred_region
      _
    $region13: #{tpu_custom_call.1} parent=1 // pred_fallthru
      _
    // Predicated region
    $region14: #{tpu_custom_call.1} parent=1 // pred_check
      _
    $region15: #{tpu_custom_call.1} parent=1 // pred_check_branch
      %32 = sbr.rel (0) target = $region17
    $region16: #{tpu_custom_call.1} parent=1 // pred_region
      _
    $region17: #{tpu_custom_call.1} parent=1 // pred_fallthru
      _
    // Predicated region
    $region18: #{tpu_custom_call.1} parent=1 // pred_check
      _
    $region19: #{tpu_custom_call.1} parent=1 // pred_check_branch
      %34 = sbr.rel (0) target = $region21
    $region20: #{tpu_custom_call.1} parent=1 // pred_region
      _
    $region21: #{tpu_custom_call.1} parent=1 // pred_fallthru
      _
    // Predicated region
    $region22: #{tpu_custom_call.1} parent=1 // pred_check
      _
    $region23: #{tpu_custom_call.1} parent=1 // pred_check_branch
      %36 = sbr.rel (0) target = $region25
    $region24: #{tpu_custom_call.1} parent=1 // pred_region
      _
    $region25: #{tpu_custom_call.1} parent=1 // pred_fallthru
      _
    // Predicated region
    $region26: #{tpu_custom_call.1} parent=1 // pred_check
      _
    $region27: #{tpu_custom_call.1} parent=1 // pred_check_branch
      %38 = sbr.rel (0) target = $region29
    $region28: #{tpu_custom_call.1} parent=1 // pred_region
      _
    $region29: #{tpu_custom_call.1} parent=1 // pred_fallthru
      _
    // Predicated region
    $region30: #{tpu_custom_call.1} parent=1 // pred_check
      _
    $region31: #{tpu_custom_call.1} parent=1 // pred_check_branch
      %40 = sbr.rel (0) target = $region33
    $region32: #{tpu_custom_call.1} parent=1 // pred_region
      %42 = dma.done [#allocation3], 256
    $region33: #{tpu_custom_call.1} parent=1 // pred_fallthru
      _
    %v44 = vld [vmem:[%s0] sm:$0xff]
    %v45 = vpack.c.bf16 %v44, %v44
    %v46 = vld [vmem:[#allocation2] sm:$0xf]
    %v47 = vld [vmem:[#allocation2 + $0x4] sm:$0xf]
    %v48 = vld [vmem:[#allocation2 + $0x8] sm:$0xf]
    %v49 = vld [vmem:[#allocation2 + $0xc] sm:$0xf]
    %v50 = vld [vmem:[%s2] sm:$0x1]
    %v52 = vperm.slane %v50, 0
    %v58 = vunpack.c.l.b16 %v46
    %v59 = vunpack.c.l.b16 %v47
    %v60 = vunpack.c.l.b16 %v48
    %v61 = vunpack.c.l.b16 %v49
    %v62 = vpack.c.b16 %v59, %v58
    %v63 = vpack.c.b16 %v61, %v60
    %vm66 = vcmask 261120
    %v68 = vsel %vm66, %v45, 0
    %70 = vmatpush.bf16.msra.mxu0 0
    %71 = vmatpush.bf16.msra.mxu0 0
    %72 = vmatpush.bf16.msra.mxu0 0
    %73 = vmatpush.bf16.msra.mxu0 0
    %74 = vmatpush.bf16.msra.mxu0 0
    %75 = vmatpush.bf16.msra.mxu0 0
    %76 = vmatpush.bf16.msra.mxu0 %v63
    %77 = vmatpush.bf16.msra.mxu0 %v62
    %78 = vmatmul.bf16.gmra.mxu0 %v68
    %v79 = vpop.f32.mrf.mxu0
    %v80 = vadd.f32 %v52, %v79
    %v81 = vpop.f32.mrf.mxu0
    %82 = vdwg.mxu0
    %v83 = vmin.f32 %v80, 0.0
    %v84 = vmul.f32 %v83, 1.442695
    %v85 = vpow.pop %v84
    %v86 = vsub.f32 %v85, 1.0
    %vm87 = vcmp.gt.f32.partialorder %v80, 0.0
    %v88 = vsel %vm87, %v80, %v86
    %v89 = vpack.c.bf16 %v88, %v88
    %v90 = vld [vmem:[%s3] sm:$0xf]
    %v91 = vld [vmem:[%s3 + $0x4] sm:$0xf]
    %v92 = vld [vmem:[%s3 + $0x8] sm:$0xf]
    %v93 = vld [vmem:[%s3 + $0xc] sm:$0xf]
    %v94 = vld [vmem:[%s3 + $0x10] sm:$0xf]
    %v95 = vld [vmem:[%s3 + $0x14] sm:$0xf]
    %v96 = vld [vmem:[%s3 + $0x18] sm:$0xf]
    %v97 = vld [vmem:[%s3 + $0x1c] sm:$0xf]
    %v98 = vld [vmem:[%s4] sm:$0x1]
    %v100 = vperm.slane %v98, 0
    %v110 = vunpack.c.l.b16 %v90
    %v111 = vunpack.c.l.b16 %v91
    %v112 = vunpack.c.l.b16 %v92
    %v113 = vunpack.c.l.b16 %v93
    %v114 = vunpack.c.l.b16 %v94
    %v115 = vunpack.c.l.b16 %v95
    %v116 = vunpack.c.l.b16 %v96
    %v117 = vunpack.c.l.b16 %v97
    %v118 = vpack.c.b16 %v111, %v110
    %v119 = vpack.c.b16 %v113, %v112
    %v120 = vpack.c.b16 %v115, %v114
    %v121 = vpack.c.b16 %v117, %v116
    %vm126 = vcmask 523264
    %v128 = vsel %vm126, %v89, 0
    %130 = vmatpush.bf16.msra.mxu0 0
    %131 = vmatpush.bf16.msra.mxu0 0
    %132 = vmatpush.bf16.msra.mxu0 0
    %133 = vmatpush.bf16.msra.mxu0 0
    %134 = vmatpush.bf16.msra.mxu0 %v121
    %135 = vmatpush.bf16.msra.mxu0 %v120
    %136 = vmatpush.bf16.msra.mxu0 %v119
    %137 = vmatpush.bf16.msra.mxu0 %v118
    %138 = vmatmul.bf16.gmra.mxu0 %v128
    %v139 = vpop.f32.mrf.mxu0
    %v140 = vadd.f32 %v100, %v139
    %v141 = vpop.f32.mrf.mxu0
    %142 = vdwg.mxu0
    %v143 = vmin.f32 %v140, 0.0
    %v144 = vmul.f32 %v143, 1.442695
    %v145 = vpow.pop %v144
    %v146 = vsub.f32 %v145, 1.0
    %vm147 = vcmp.gt.f32.partialorder %v140, 0.0
    %v148 = vsel %vm147, %v140, %v146
    %v149 = vpack.c.bf16 %v148, %v148
    %v150 = vld [vmem:[%s5] sm:$0xf]
    %v151 = vld [vmem:[%s5 + $0x4] sm:$0xf]
    %v152 = vld [vmem:[%s5 + $0x8] sm:$0xf]
    %v153 = vld [vmem:[%s5 + $0xc] sm:$0xf]
    %v154 = vld [vmem:[%s5 + $0x10] sm:$0xf]
    %v155 = vld [vmem:[%s5 + $0x14] sm:$0xf]
    %v156 = vld [vmem:[%s5 + $0x18] sm:$0xf]
    %v157 = vld [vmem:[%s5 + $0x1c] sm:$0xf]
    %v158 = vld [vmem:[%s6] sm:$0x1]
    %v160 = vperm.slane %v158, 0
    %v170 = vunpack.c.l.b16 %v150
    %v171 = vunpack.c.l.b16 %v151
    %v172 = vunpack.c.l.b16 %v152
    %v173 = vunpack.c.l.b16 %v153
    %v174 = vunpack.c.l.b16 %v154
    %v175 = vunpack.c.l.b16 %v155
    %v176 = vunpack.c.l.b16 %v156
    %v177 = vunpack.c.l.b16 %v157
    %v178 = vpack.c.b16 %v171, %v170
    %v179 = vpack.c.b16 %v173, %v172
    %v180 = vpack.c.b16 %v175, %v174
    %v181 = vpack.c.b16 %v177, %v176
    %v187 = vsel %vm126, %v149, 0
    %189 = vmatpush.bf16.msra.mxu0 0
    %190 = vmatpush.bf16.msra.mxu0 0
    %191 = vmatpush.bf16.msra.mxu0 0
    %192 = vmatpush.bf16.msra.mxu0 0
    %193 = vmatpush.bf16.msra.mxu0 %v181
    %194 = vmatpush.bf16.msra.mxu0 %v180
    %195 = vmatpush.bf16.msra.mxu0 %v179
    %196 = vmatpush.bf16.msra.mxu0 %v178
    %197 = vmatmul.bf16.gmra.mxu0 %v187
    %v198 = vpop.f32.mrf.mxu0
    %v199 = vadd.f32 %v160, %v198
    %v200 = vpop.f32.mrf.mxu0
    %201 = vdwg.mxu0
    %vm202 = vcmask 130048
    %203 = vst.msk [vmem:[#allocation5] sm:$0xff] %vm202, %v199
    // Predicated region
    $region34: #{tpu_custom_call.1} parent=1 // pred_check
      _
    $region35: #{tpu_custom_call.1} parent=1 // pred_check_branch
      %205 = sbr.rel (0) target = $region37
    $region36: #{tpu_custom_call.1} parent=1 // pred_region
      %207 = vsyncadd [#allocation4], 0
      %s209 = sshll.u32 [#allocation5], 4
      %s210 = int_to_ptr.vmem [resolvable:$true] %s209
      %s211 = sshll.u32 %s7, 4
      %s212 = int_to_ptr.hbm [resolvable:$true] %s211
      %214 = dma.vmem_to_hbm [thread:$0]  %s210, 128, %s212, [#allocation4]
    $region37: #{tpu_custom_call.1} parent=1 // pred_fallthru
      _
    // Predicated region
    $region38: #{tpu_custom_call.1} parent=1 // pred_check
      _
    $region39: #{tpu_custom_call.1} parent=1 // pred_check_branch
      %216 = sbr.rel (0) target = $region41
    $region40: #{tpu_custom_call.1} parent=1 // pred_region
      %218 = dma.done [#allocation4], 128
    $region41: #{tpu_custom_call.1} parent=1 // pred_fallthru
      _
    %219 = vsyncpa [#allocation3], 1
    %220 = vsyncpa [#allocation4], 1

</llo_original>
